<compile_context>
chip_gen: v5e
topology: v5e:2x2
jax: 0.10.0
libtpu: 0.0.40
codegen_flags: <defaults>
</compile_context>

<pallas_src>
import functools

import jax
import jax.numpy as jnp
from jax.experimental import pallas as pl
from jax.experimental.pallas import tpu as pltpu


def _round_up(v, m):
    return ((v + m - 1) // m) * m


def _conv_relu_kernel(x_ref, w_ref, b_ref, o_ref, *, kh, kw, in_w, in_c, m_lane):
    """Fused valid conv (kh x kw) + bias + ReLU on a lane-flattened input.

    x_ref: (C, L)          channel-major input, spatial flattened as n*H*W (+ zero pad)
    w_ref: (OC, KH*KW*C)   weight, k index = (di*KW + dj)*C + c
    b_ref: (OC, 1)         bias (broadcast along lanes)
    o_ref: (OC, m_lane)    lane-dense output over flattened (n, h, w) positions
    """
    oc = o_ref.shape[0]
    acc = jnp.zeros((oc, m_lane), jnp.float32)
    # Pure-VPU: kh*kw*in_c rank-1 broadcast multiply-accumulates (static unroll).
    for t in range(kh * kw):
        di, dj = t // kw, t % kw
        s = di * in_w + dj                                    # flat tap shift
        for cc in range(in_c):
            w_col = w_ref[:, t * in_c + cc: t * in_c + cc + 1]  # (OC, 1)
            x_row = x_ref[cc:cc + 1, s:s + m_lane]              # (1, m_lane)
            acc = acc + w_col * x_row
    o_ref[...] = jnp.maximum(acc + b_ref[...], 0.0).astype(o_ref.dtype)


@jax.jit
def simple_forward(x_nchw, weight_oihw, bias):
    """relu(conv2d(x)) matching the PyTorch module (NCHW in, NCHW out)."""
    n, c, h, w = x_nchw.shape
    oc, ic, kh, kw = weight_oihw.shape
    oh, ow = h - kh + 1, w - kw + 1

    m_flat = n * h * w                               # flattened output positions
    m_lane = _round_up(m_flat, 128)                  # lane-dense output width
    max_shift = (kh - 1) * w + (kw - 1)              # largest tap offset
    l_in = _round_up(m_lane + max_shift, 128)        # padded input length

    # Channel-major, flattened spatial axis; zero-pad so every tap's static
    # slice of length m_lane stays in bounds.  Invalid "wrap" positions produce
    # finite garbage that is sliced away below.
    x_flat = jnp.transpose(x_nchw, (1, 0, 2, 3)).reshape(c, m_flat)
    x_flat = jnp.pad(x_flat, ((0, 0), (0, l_in - m_flat)))

    # Weight in (oc, (di, dj, c)) order to match the kernel's tap indexing.
    w2 = jnp.transpose(weight_oihw, (0, 2, 3, 1)).reshape(oc, kh * kw * ic)
    b2 = bias.reshape(oc, 1)

    kernel = functools.partial(
        _conv_relu_kernel, kh=kh, kw=kw, in_w=w, in_c=ic, m_lane=m_lane)

    out = pl.pallas_call(
        kernel,
        out_shape=jax.ShapeDtypeStruct((oc, m_lane), x_nchw.dtype),
        grid=(1,),                                   # whole problem in one step
        in_specs=[
            pl.BlockSpec((c, l_in), lambda i: (0, 0)),
            pl.BlockSpec((oc, kh * kw * ic), lambda i: (0, 0)),
            pl.BlockSpec((oc, 1), lambda i: (0, 0)),
        ],
        out_specs=pl.BlockSpec((oc, m_lane), lambda i: (0, 0)),
        compiler_params=pltpu.CompilerParams(
            dimension_semantics=("arbitrary",)),
    )(x_flat, w2, b2)

    # Valid conv outputs live at flattened positions (n, hh < OH, ww < OW).
    y = out[:, :m_flat].reshape(oc, n, h, w)[:, :, :oh, :ow]
    return jnp.transpose(y, (1, 0, 2, 3))            # back to NCHW


if __name__ == "__main__":
    key = jax.random.PRNGKey(0)
    k_x, k_w = jax.random.split(key)

    out_channels = 8
    in_channels = 3
    N, H, W = 2, 16, 16

    # Deterministic parameter init mirroring the module's __init__:
    #   weight ~ N(0, 0.01), bias = 0
    weight = 0.01 * jax.random.normal(
        k_w, (out_channels, in_channels, 3, 3), dtype=jnp.float32)
    bias = jnp.zeros((out_channels,), dtype=jnp.float32)

    x = jax.random.normal(k_x, (N, in_channels, H, W), dtype=jnp.float32)

    y = simple_forward(x, weight, bias)
    y = jax.block_until_ready(y)

    # Sanity check against XLA's conv (reference semantics: valid conv + relu).
    ref = jax.lax.conv_general_dilated(
        x, weight, window_strides=(1, 1), padding="VALID",
        dimension_numbers=("NCHW", "OIHW", "NCHW"))
    ref = jnp.maximum(ref + bias.reshape(1, -1, 1, 1), 0.0)
    assert y.shape == (N, out_channels, H - 2, W - 2)
    assert jnp.allclose(y, ref, atol=1e-5, rtol=1e-5)

    print("KERNEL_OK")
</pallas_src>

<mosaic_0001>
module attributes {stable_mosaic.version = 11 : i64} {
  func.func @_conv_relu_kernel(%arg0: i32, %arg1: memref<3x640xf32, #tpu.memory_space<vmem>>, %arg2: memref<8x27xf32, #tpu.memory_space<vmem>>, %arg3: memref<8x1xf32, #tpu.memory_space<vmem>>, %arg4: memref<8x512xf32, #tpu.memory_space<vmem>>) attributes {dimension_semantics = [#tpu.dimension_semantics<arbitrary>], iteration_bounds = array<i64: 1>, scalar_prefetch = 0 : i64, scratch_operands = 0 : i64, tpu.core_type = #tpu.core_type<tc>, window_params = [{pipeline_mode = #tpu.pipeline_mode<synchronous>, transform_indices = @transform_0, window_bounds = array<i64: 3, 640>}, {pipeline_mode = #tpu.pipeline_mode<synchronous>, transform_indices = @transform_1, window_bounds = array<i64: 8, 27>}, {pipeline_mode = #tpu.pipeline_mode<synchronous>, transform_indices = @transform_2, window_bounds = array<i64: 8, 1>}, {pipeline_mode = #tpu.pipeline_mode<synchronous>, transform_indices = @transform_3, window_bounds = array<i64: 8, 512>}]} {
    %cst = arith.constant 0.000000e+00 : f32
    %0 = vector.broadcast %cst : f32 to vector<8x512xf32>
    %c0 = arith.constant 0 : index
    %c0_0 = arith.constant 0 : index
    %1 = vector.load %arg2[%c0, %c0_0] : memref<8x27xf32, #tpu.memory_space<vmem>>, vector<8x1xf32>
    %c0_1 = arith.constant 0 : index
    %c0_2 = arith.constant 0 : index
    %2 = vector.load %arg1[%c0_1, %c0_2] : memref<3x640xf32, #tpu.memory_space<vmem>>, vector<1x512xf32>
    %3 = vector.broadcast %1 : vector<8x1xf32> to vector<8x512xf32>
    %4 = vector.broadcast %2 : vector<1x512xf32> to vector<8x512xf32>
    %5 = arith.mulf %3, %4 : vector<8x512xf32>
    %6 = arith.addf %0, %5 : vector<8x512xf32>
    %c0_3 = arith.constant 0 : index
    %c1 = arith.constant 1 : index
    %7 = vector.load %arg2[%c0_3, %c1] : memref<8x27xf32, #tpu.memory_space<vmem>>, vector<8x1xf32>
    %c1_4 = arith.constant 1 : index
    %c0_5 = arith.constant 0 : index
    %8 = vector.load %arg1[%c1_4, %c0_5] : memref<3x640xf32, #tpu.memory_space<vmem>>, vector<1x512xf32>
    %9 = vector.broadcast %7 : vector<8x1xf32> to vector<8x512xf32>
    %10 = vector.broadcast %8 : vector<1x512xf32> to vector<8x512xf32>
    %11 = arith.mulf %9, %10 : vector<8x512xf32>
    %12 = arith.addf %6, %11 : vector<8x512xf32>
    %c0_6 = arith.constant 0 : index
    %c2 = arith.constant 2 : index
    %13 = vector.load %arg2[%c0_6, %c2] : memref<8x27xf32, #tpu.memory_space<vmem>>, vector<8x1xf32>
    %c2_7 = arith.constant 2 : index
    %c0_8 = arith.constant 0 : index
    %14 = vector.load %arg1[%c2_7, %c0_8] : memref<3x640xf32, #tpu.memory_space<vmem>>, vector<1x512xf32>
    %15 = vector.broadcast %13 : vector<8x1xf32> to vector<8x512xf32>
    %16 = vector.broadcast %14 : vector<1x512xf32> to vector<8x512xf32>
    %17 = arith.mulf %15, %16 : vector<8x512xf32>
    %18 = arith.addf %12, %17 : vector<8x512xf32>
    %c0_9 = arith.constant 0 : index
    %c3 = arith.constant 3 : index
    %19 = vector.load %arg2[%c0_9, %c3] : memref<8x27xf32, #tpu.memory_space<vmem>>, vector<8x1xf32>
    %c0_10 = arith.constant 0 : index
    %c1_11 = arith.constant 1 : index
    %20 = vector.load %arg1[%c0_10, %c1_11] : memref<3x640xf32, #tpu.memory_space<vmem>>, vector<1x512xf32>
    %21 = vector.broadcast %19 : vector<8x1xf32> to vector<8x512xf32>
    %22 = vector.broadcast %20 : vector<1x512xf32> to vector<8x512xf32>
    %23 = arith.mulf %21, %22 : vector<8x512xf32>
    %24 = arith.addf %18, %23 : vector<8x512xf32>
    %c0_12 = arith.constant 0 : index
    %c4 = arith.constant 4 : index
    %25 = vector.load %arg2[%c0_12, %c4] : memref<8x27xf32, #tpu.memory_space<vmem>>, vector<8x1xf32>
    %c1_13 = arith.constant 1 : index
    %c1_14 = arith.constant 1 : index
    %26 = vector.load %arg1[%c1_13, %c1_14] : memref<3x640xf32, #tpu.memory_space<vmem>>, vector<1x512xf32>
    %27 = vector.broadcast %25 : vector<8x1xf32> to vector<8x512xf32>
    %28 = vector.broadcast %26 : vector<1x512xf32> to vector<8x512xf32>
    %29 = arith.mulf %27, %28 : vector<8x512xf32>
    %30 = arith.addf %24, %29 : vector<8x512xf32>
    %c0_15 = arith.constant 0 : index
    %c5 = arith.constant 5 : index
    %31 = vector.load %arg2[%c0_15, %c5] : memref<8x27xf32, #tpu.memory_space<vmem>>, vector<8x1xf32>
    %c2_16 = arith.constant 2 : index
    %c1_17 = arith.constant 1 : index
    %32 = vector.load %arg1[%c2_16, %c1_17] : memref<3x640xf32, #tpu.memory_space<vmem>>, vector<1x512xf32>
    %33 = vector.broadcast %31 : vector<8x1xf32> to vector<8x512xf32>
    %34 = vector.broadcast %32 : vector<1x512xf32> to vector<8x512xf32>
    %35 = arith.mulf %33, %34 : vector<8x512xf32>
    %36 = arith.addf %30, %35 : vector<8x512xf32>
    %c0_18 = arith.constant 0 : index
    %c6 = arith.constant 6 : index
    %37 = vector.load %arg2[%c0_18, %c6] : memref<8x27xf32, #tpu.memory_space<vmem>>, vector<8x1xf32>
    %c0_19 = arith.constant 0 : index
    %c2_20 = arith.constant 2 : index
    %38 = vector.load %arg1[%c0_19, %c2_20] : memref<3x640xf32, #tpu.memory_space<vmem>>, vector<1x512xf32>
    %39 = vector.broadcast %37 : vector<8x1xf32> to vector<8x512xf32>
    %40 = vector.broadcast %38 : vector<1x512xf32> to vector<8x512xf32>
    %41 = arith.mulf %39, %40 : vector<8x512xf32>
    %42 = arith.addf %36, %41 : vector<8x512xf32>
    %c0_21 = arith.constant 0 : index
    %c7 = arith.constant 7 : index
    %43 = vector.load %arg2[%c0_21, %c7] : memref<8x27xf32, #tpu.memory_space<vmem>>, vector<8x1xf32>
    %c1_22 = arith.constant 1 : index
    %c2_23 = arith.constant 2 : index
    %44 = vector.load %arg1[%c1_22, %c2_23] : memref<3x640xf32, #tpu.memory_space<vmem>>, vector<1x512xf32>
    %45 = vector.broadcast %43 : vector<8x1xf32> to vector<8x512xf32>
    %46 = vector.broadcast %44 : vector<1x512xf32> to vector<8x512xf32>
    %47 = arith.mulf %45, %46 : vector<8x512xf32>
    %48 = arith.addf %42, %47 : vector<8x512xf32>
    %c0_24 = arith.constant 0 : index
    %c8 = arith.constant 8 : index
    %49 = vector.load %arg2[%c0_24, %c8] : memref<8x27xf32, #tpu.memory_space<vmem>>, vector<8x1xf32>
    %c2_25 = arith.constant 2 : index
    %c2_26 = arith.constant 2 : index
    %50 = vector.load %arg1[%c2_25, %c2_26] : memref<3x640xf32, #tpu.memory_space<vmem>>, vector<1x512xf32>
    %51 = vector.broadcast %49 : vector<8x1xf32> to vector<8x512xf32>
    %52 = vector.broadcast %50 : vector<1x512xf32> to vector<8x512xf32>
    %53 = arith.mulf %51, %52 : vector<8x512xf32>
    %54 = arith.addf %48, %53 : vector<8x512xf32>
    %c0_27 = arith.constant 0 : index
    %c9 = arith.constant 9 : index
    %55 = vector.load %arg2[%c0_27, %c9] : memref<8x27xf32, #tpu.memory_space<vmem>>, vector<8x1xf32>
    %c0_28 = arith.constant 0 : index
    %c16 = arith.constant 16 : index
    %56 = vector.load %arg1[%c0_28, %c16] : memref<3x640xf32, #tpu.memory_space<vmem>>, vector<1x512xf32>
    %57 = vector.broadcast %55 : vector<8x1xf32> to vector<8x512xf32>
    %58 = vector.broadcast %56 : vector<1x512xf32> to vector<8x512xf32>
    %59 = arith.mulf %57, %58 : vector<8x512xf32>
    %60 = arith.addf %54, %59 : vector<8x512xf32>
    %c0_29 = arith.constant 0 : index
    %c10 = arith.constant 10 : index
    %61 = vector.load %arg2[%c0_29, %c10] : memref<8x27xf32, #tpu.memory_space<vmem>>, vector<8x1xf32>
    %c1_30 = arith.constant 1 : index
    %c16_31 = arith.constant 16 : index
    %62 = vector.load %arg1[%c1_30, %c16_31] : memref<3x640xf32, #tpu.memory_space<vmem>>, vector<1x512xf32>
    %63 = vector.broadcast %61 : vector<8x1xf32> to vector<8x512xf32>
    %64 = vector.broadcast %62 : vector<1x512xf32> to vector<8x512xf32>
    %65 = arith.mulf %63, %64 : vector<8x512xf32>
    %66 = arith.addf %60, %65 : vector<8x512xf32>
    %c0_32 = arith.constant 0 : index
    %c11 = arith.constant 11 : index
    %67 = vector.load %arg2[%c0_32, %c11] : memref<8x27xf32, #tpu.memory_space<vmem>>, vector<8x1xf32>
    %c2_33 = arith.constant 2 : index
    %c16_34 = arith.constant 16 : index
    %68 = vector.load %arg1[%c2_33, %c16_34] : memref<3x640xf32, #tpu.memory_space<vmem>>, vector<1x512xf32>
    %69 = vector.broadcast %67 : vector<8x1xf32> to vector<8x512xf32>
    %70 = vector.broadcast %68 : vector<1x512xf32> to vector<8x512xf32>
    %71 = arith.mulf %69, %70 : vector<8x512xf32>
    %72 = arith.addf %66, %71 : vector<8x512xf32>
    %c0_35 = arith.constant 0 : index
    %c12 = arith.constant 12 : index
    %73 = vector.load %arg2[%c0_35, %c12] : memref<8x27xf32, #tpu.memory_space<vmem>>, vector<8x1xf32>
    %c0_36 = arith.constant 0 : index
    %c17 = arith.constant 17 : index
    %74 = vector.load %arg1[%c0_36, %c17] : memref<3x640xf32, #tpu.memory_space<vmem>>, vector<1x512xf32>
    %75 = vector.broadcast %73 : vector<8x1xf32> to vector<8x512xf32>
    %76 = vector.broadcast %74 : vector<1x512xf32> to vector<8x512xf32>
    %77 = arith.mulf %75, %76 : vector<8x512xf32>
    %78 = arith.addf %72, %77 : vector<8x512xf32>
    %c0_37 = arith.constant 0 : index
    %c13 = arith.constant 13 : index
    %79 = vector.load %arg2[%c0_37, %c13] : memref<8x27xf32, #tpu.memory_space<vmem>>, vector<8x1xf32>
    %c1_38 = arith.constant 1 : index
    %c17_39 = arith.constant 17 : index
    %80 = vector.load %arg1[%c1_38, %c17_39] : memref<3x640xf32, #tpu.memory_space<vmem>>, vector<1x512xf32>
    %81 = vector.broadcast %79 : vector<8x1xf32> to vector<8x512xf32>
    %82 = vector.broadcast %80 : vector<1x512xf32> to vector<8x512xf32>
    %83 = arith.mulf %81, %82 : vector<8x512xf32>
    %84 = arith.addf %78, %83 : vector<8x512xf32>
    %c0_40 = arith.constant 0 : index
    %c14 = arith.constant 14 : index
    %85 = vector.load %arg2[%c0_40, %c14] : memref<8x27xf32, #tpu.memory_space<vmem>>, vector<8x1xf32>
    %c2_41 = arith.constant 2 : index
    %c17_42 = arith.constant 17 : index
    %86 = vector.load %arg1[%c2_41, %c17_42] : memref<3x640xf32, #tpu.memory_space<vmem>>, vector<1x512xf32>
    %87 = vector.broadcast %85 : vector<8x1xf32> to vector<8x512xf32>
    %88 = vector.broadcast %86 : vector<1x512xf32> to vector<8x512xf32>
    %89 = arith.mulf %87, %88 : vector<8x512xf32>
    %90 = arith.addf %84, %89 : vector<8x512xf32>
    %c0_43 = arith.constant 0 : index
    %c15 = arith.constant 15 : index
    %91 = vector.load %arg2[%c0_43, %c15] : memref<8x27xf32, #tpu.memory_space<vmem>>, vector<8x1xf32>
    %c0_44 = arith.constant 0 : index
    %c18 = arith.constant 18 : index
    %92 = vector.load %arg1[%c0_44, %c18] : memref<3x640xf32, #tpu.memory_space<vmem>>, vector<1x512xf32>
    %93 = vector.broadcast %91 : vector<8x1xf32> to vector<8x512xf32>
    %94 = vector.broadcast %92 : vector<1x512xf32> to vector<8x512xf32>
    %95 = arith.mulf %93, %94 : vector<8x512xf32>
    %96 = arith.addf %90, %95 : vector<8x512xf32>
    %c0_45 = arith.constant 0 : index
    %c16_46 = arith.constant 16 : index
    %97 = vector.load %arg2[%c0_45, %c16_46] : memref<8x27xf32, #tpu.memory_space<vmem>>, vector<8x1xf32>
    %c1_47 = arith.constant 1 : index
    %c18_48 = arith.constant 18 : index
    %98 = vector.load %arg1[%c1_47, %c18_48] : memref<3x640xf32, #tpu.memory_space<vmem>>, vector<1x512xf32>
    %99 = vector.broadcast %97 : vector<8x1xf32> to vector<8x512xf32>
    %100 = vector.broadcast %98 : vector<1x512xf32> to vector<8x512xf32>
    %101 = arith.mulf %99, %100 : vector<8x512xf32>
    %102 = arith.addf %96, %101 : vector<8x512xf32>
    %c0_49 = arith.constant 0 : index
    %c17_50 = arith.constant 17 : index
    %103 = vector.load %arg2[%c0_49, %c17_50] : memref<8x27xf32, #tpu.memory_space<vmem>>, vector<8x1xf32>
    %c2_51 = arith.constant 2 : index
    %c18_52 = arith.constant 18 : index
    %104 = vector.load %arg1[%c2_51, %c18_52] : memref<3x640xf32, #tpu.memory_space<vmem>>, vector<1x512xf32>
    %105 = vector.broadcast %103 : vector<8x1xf32> to vector<8x512xf32>
    %106 = vector.broadcast %104 : vector<1x512xf32> to vector<8x512xf32>
    %107 = arith.mulf %105, %106 : vector<8x512xf32>
    %108 = arith.addf %102, %107 : vector<8x512xf32>
    %c0_53 = arith.constant 0 : index
    %c18_54 = arith.constant 18 : index
    %109 = vector.load %arg2[%c0_53, %c18_54] : memref<8x27xf32, #tpu.memory_space<vmem>>, vector<8x1xf32>
    %c0_55 = arith.constant 0 : index
    %c32 = arith.constant 32 : index
    %110 = vector.load %arg1[%c0_55, %c32] : memref<3x640xf32, #tpu.memory_space<vmem>>, vector<1x512xf32>
    %111 = vector.broadcast %109 : vector<8x1xf32> to vector<8x512xf32>
    %112 = vector.broadcast %110 : vector<1x512xf32> to vector<8x512xf32>
    %113 = arith.mulf %111, %112 : vector<8x512xf32>
    %114 = arith.addf %108, %113 : vector<8x512xf32>
    %c0_56 = arith.constant 0 : index
    %c19 = arith.constant 19 : index
    %115 = vector.load %arg2[%c0_56, %c19] : memref<8x27xf32, #tpu.memory_space<vmem>>, vector<8x1xf32>
    %c1_57 = arith.constant 1 : index
    %c32_58 = arith.constant 32 : index
    %116 = vector.load %arg1[%c1_57, %c32_58] : memref<3x640xf32, #tpu.memory_space<vmem>>, vector<1x512xf32>
    %117 = vector.broadcast %115 : vector<8x1xf32> to vector<8x512xf32>
    %118 = vector.broadcast %116 : vector<1x512xf32> to vector<8x512xf32>
    %119 = arith.mulf %117, %118 : vector<8x512xf32>
    %120 = arith.addf %114, %119 : vector<8x512xf32>
    %c0_59 = arith.constant 0 : index
    %c20 = arith.constant 20 : index
    %121 = vector.load %arg2[%c0_59, %c20] : memref<8x27xf32, #tpu.memory_space<vmem>>, vector<8x1xf32>
    %c2_60 = arith.constant 2 : index
    %c32_61 = arith.constant 32 : index
    %122 = vector.load %arg1[%c2_60, %c32_61] : memref<3x640xf32, #tpu.memory_space<vmem>>, vector<1x512xf32>
    %123 = vector.broadcast %121 : vector<8x1xf32> to vector<8x512xf32>
    %124 = vector.broadcast %122 : vector<1x512xf32> to vector<8x512xf32>
    %125 = arith.mulf %123, %124 : vector<8x512xf32>
    %126 = arith.addf %120, %125 : vector<8x512xf32>
    %c0_62 = arith.constant 0 : index
    %c21 = arith.constant 21 : index
    %127 = vector.load %arg2[%c0_62, %c21] : memref<8x27xf32, #tpu.memory_space<vmem>>, vector<8x1xf32>
    %c0_63 = arith.constant 0 : index
    %c33 = arith.constant 33 : index
    %128 = vector.load %arg1[%c0_63, %c33] : memref<3x640xf32, #tpu.memory_space<vmem>>, vector<1x512xf32>
    %129 = vector.broadcast %127 : vector<8x1xf32> to vector<8x512xf32>
    %130 = vector.broadcast %128 : vector<1x512xf32> to vector<8x512xf32>
    %131 = arith.mulf %129, %130 : vector<8x512xf32>
    %132 = arith.addf %126, %131 : vector<8x512xf32>
    %c0_64 = arith.constant 0 : index
    %c22 = arith.constant 22 : index
    %133 = vector.load %arg2[%c0_64, %c22] : memref<8x27xf32, #tpu.memory_space<vmem>>, vector<8x1xf32>
    %c1_65 = arith.constant 1 : index
    %c33_66 = arith.constant 33 : index
    %134 = vector.load %arg1[%c1_65, %c33_66] : memref<3x640xf32, #tpu.memory_space<vmem>>, vector<1x512xf32>
    %135 = vector.broadcast %133 : vector<8x1xf32> to vector<8x512xf32>
    %136 = vector.broadcast %134 : vector<1x512xf32> to vector<8x512xf32>
    %137 = arith.mulf %135, %136 : vector<8x512xf32>
    %138 = arith.addf %132, %137 : vector<8x512xf32>
    %c0_67 = arith.constant 0 : index
    %c23 = arith.constant 23 : index
    %139 = vector.load %arg2[%c0_67, %c23] : memref<8x27xf32, #tpu.memory_space<vmem>>, vector<8x1xf32>
    %c2_68 = arith.constant 2 : index
    %c33_69 = arith.constant 33 : index
    %140 = vector.load %arg1[%c2_68, %c33_69] : memref<3x640xf32, #tpu.memory_space<vmem>>, vector<1x512xf32>
    %141 = vector.broadcast %139 : vector<8x1xf32> to vector<8x512xf32>
    %142 = vector.broadcast %140 : vector<1x512xf32> to vector<8x512xf32>
    %143 = arith.mulf %141, %142 : vector<8x512xf32>
    %144 = arith.addf %138, %143 : vector<8x512xf32>
    %c0_70 = arith.constant 0 : index
    %c24 = arith.constant 24 : index
    %145 = vector.load %arg2[%c0_70, %c24] : memref<8x27xf32, #tpu.memory_space<vmem>>, vector<8x1xf32>
    %c0_71 = arith.constant 0 : index
    %c34 = arith.constant 34 : index
    %146 = vector.load %arg1[%c0_71, %c34] : memref<3x640xf32, #tpu.memory_space<vmem>>, vector<1x512xf32>
    %147 = vector.broadcast %145 : vector<8x1xf32> to vector<8x512xf32>
    %148 = vector.broadcast %146 : vector<1x512xf32> to vector<8x512xf32>
    %149 = arith.mulf %147, %148 : vector<8x512xf32>
    %150 = arith.addf %144, %149 : vector<8x512xf32>
    %c0_72 = arith.constant 0 : index
    %c25 = arith.constant 25 : index
    %151 = vector.load %arg2[%c0_72, %c25] : memref<8x27xf32, #tpu.memory_space<vmem>>, vector<8x1xf32>
    %c1_73 = arith.constant 1 : index
    %c34_74 = arith.constant 34 : index
    %152 = vector.load %arg1[%c1_73, %c34_74] : memref<3x640xf32, #tpu.memory_space<vmem>>, vector<1x512xf32>
    %153 = vector.broadcast %151 : vector<8x1xf32> to vector<8x512xf32>
    %154 = vector.broadcast %152 : vector<1x512xf32> to vector<8x512xf32>
    %155 = arith.mulf %153, %154 : vector<8x512xf32>
    %156 = arith.addf %150, %155 : vector<8x512xf32>
    %c0_75 = arith.constant 0 : index
    %c26 = arith.constant 26 : index
    %157 = vector.load %arg2[%c0_75, %c26] : memref<8x27xf32, #tpu.memory_space<vmem>>, vector<8x1xf32>
    %c2_76 = arith.constant 2 : index
    %c34_77 = arith.constant 34 : index
    %158 = vector.load %arg1[%c2_76, %c34_77] : memref<3x640xf32, #tpu.memory_space<vmem>>, vector<1x512xf32>
    %159 = vector.broadcast %157 : vector<8x1xf32> to vector<8x512xf32>
    %160 = vector.broadcast %158 : vector<1x512xf32> to vector<8x512xf32>
    %161 = arith.mulf %159, %160 : vector<8x512xf32>
    %162 = arith.addf %156, %161 : vector<8x512xf32>
    %c0_78 = arith.constant 0 : index
    %c0_79 = arith.constant 0 : index
    %163 = vector.load %arg3[%c0_78, %c0_79] : memref<8x1xf32, #tpu.memory_space<vmem>>, vector<8x1xf32>
    %164 = vector.broadcast %163 : vector<8x1xf32> to vector<8x512xf32>
    %165 = arith.addf %162, %164 : vector<8x512xf32>
    %cst_80 = arith.constant 0.000000e+00 : f32
    %166 = vector.broadcast %cst_80 : f32 to vector<8x512xf32>
    %167 = arith.maximumf %165, %166 : vector<8x512xf32>
    %c0_81 = arith.constant 0 : index
    %c0_82 = arith.constant 0 : index
    %168 = vector.load %arg4[%c0_81, %c0_82] : memref<8x512xf32, #tpu.memory_space<vmem>>, vector<8x512xf32>
    tpu.vector_store %arg4[%c0_81, %c0_82], %167 {strides = array<i32>} : memref<8x512xf32, #tpu.memory_space<vmem>>, vector<8x512xf32>,
    return
  }
  func.func @transform_0(%arg0: i32) -> (i32, i32) {
    %c0_i32 = arith.constant 0 : i32
    %c0_i32_0 = arith.constant 0 : i32
    %c0_i32_1 = arith.constant 0 : i32
    return %c0_i32, %c0_i32_0 : i32, i32
  }
  func.func @transform_1(%arg0: i32) -> (i32, i32) {
    %c0_i32 = arith.constant 0 : i32
    %c0_i32_0 = arith.constant 0 : i32
    %c0_i32_1 = arith.constant 0 : i32
    return %c0_i32, %c0_i32_0 : i32, i32
  }
  func.func @transform_2(%arg0: i32) -> (i32, i32) {
    %c0_i32 = arith.constant 0 : i32
    %c0_i32_0 = arith.constant 0 : i32
    %c0_i32_1 = arith.constant 0 : i32
    return %c0_i32, %c0_i32_0 : i32, i32
  }
  func.func @transform_3(%arg0: i32) -> (i32, i32) {
    %c0_i32 = arith.constant 0 : i32
    %c0_i32_0 = arith.constant 0 : i32
    %c0_i32_1 = arith.constant 0 : i32
    return %c0_i32, %c0_i32_0 : i32, i32
  }
}

</mosaic_0001>

<llo_original>
// kernel: simple_forward.1
$region0: #{simple_forward.1}
  #allocation0 [shape = 'u32[]', space=smem, size = 0x4, offset = 0x4, fixed_abs, tag = 'smem constant byte address 0x4 - core index']
  #allocation1 [shape = 'u32[72,128]{1,0:T(1,128)}', space=vmem, size = 0x9000, scoped, tag = 'internal scratch']
  %s0 = inlined_call_operand.vmem [shape: f32[3,640], index: 0, kind: input, shape index: {}]
  %s1 = inlined_call_operand.vmem [shape: f32[8,27], index: 1, kind: input, shape index: {}]
  %s2 = inlined_call_operand.vmem [shape: f32[8,1], index: 2, kind: input, shape index: {}]
  %s3 = inlined_call_operand.vmem [shape: f32[8,512], index: 3, kind: output, shape index: {}]
  %s4 = sld [smem:[#allocation0]]
  $region22: #{simple_forward.1} parent=0
    _
  %s6 = ssub.s32 1, %s4
  %s7 = scalar_select 0, %s6, %s4
  // Predicated region
  $region2: #{simple_forward.1} parent=0 // pred_check
    _
  $region3: #{simple_forward.1} parent=0 // pred_check_branch
    %9 = sbr.rel (0) target = $region5
  $region4: #{simple_forward.1} parent=0 // pred_region
    _
  $region5: #{simple_forward.1} parent=0 // pred_fallthru
    _
  // Predicated region
  $region6: #{simple_forward.1} parent=0 // pred_check
    _
  $region7: #{simple_forward.1} parent=0 // pred_check_branch
    %11 = sbr.rel (0) target = $region9
  $region8: #{simple_forward.1} parent=0 // pred_region
    _
  $region9: #{simple_forward.1} parent=0 // pred_fallthru
    _
  // Predicated region
  $region10: #{simple_forward.1} parent=0 // pred_check
    _
  $region11: #{simple_forward.1} parent=0 // pred_check_branch
    %13 = sbr.rel (0) target = $region13
  $region12: #{simple_forward.1} parent=0 // pred_region
    _
  $region13: #{simple_forward.1} parent=0 // pred_fallthru
    _
  %v14 = vld [vmem:[%s1] sm:$0xff]
  %v15 = vld [vmem:[%s0] ss:$4 sm:$0xf]
  %17 = vset.pattern.permute.xlu0 0
  %18 = vperm.xlu0 %17, %v14
  %v19 = vpop.permute.xlu0 %18
  %v22 = vperm.slane %v15, 0
  %v23 = vperm.slane %v15, 1
  %v24 = vperm.slane %v15, 2
  %v25 = vperm.slane %v15, 3
  %v30 = vmul.f32 %v19, %v22
  %v31 = vmul.f32 %v19, %v23
  %v32 = vmul.f32 %v19, %v24
  %v33 = vmul.f32 %v19, %v25
  %v34 = vadd.f32 %v30, 0.0
  %v35 = vadd.f32 %v31, 0.0
  %v36 = vadd.f32 %v32, 0.0
  %v37 = vadd.f32 %v33, 0.0
  %s38 = scalar_lea.vmem %s0, 1
  %v39 = vld [vmem:[%s38] ss:$4 sm:$0xf]
  %40 = vset.pattern.permute.xlu0 1
  %41 = vperm.xlu0 %40, %v14
  %v42 = vpop.permute.xlu0 %41
  %v45 = vperm.slane %v39, 0
  %v46 = vperm.slane %v39, 1
  %v47 = vperm.slane %v39, 2
  %v48 = vperm.slane %v39, 3
  %v53 = vmul.f32 %v42, %v45
  %v54 = vmul.f32 %v42, %v46
  %v55 = vmul.f32 %v42, %v47
  %v56 = vmul.f32 %v42, %v48
  %v57 = vadd.f32 %v34, %v53
  %v58 = vadd.f32 %v35, %v54
  %v59 = vadd.f32 %v36, %v55
  %v60 = vadd.f32 %v37, %v56
  %s61 = scalar_lea.vmem %s0, 2
  %v62 = vld [vmem:[%s61] ss:$4 sm:$0xf]
  %63 = vset.pattern.permute.xlu0 2
  %64 = vperm.xlu0 %63, %v14
  %v65 = vpop.permute.xlu0 %64
  %v68 = vperm.slane %v62, 0
  %v69 = vperm.slane %v62, 1
  %v70 = vperm.slane %v62, 2
  %v71 = vperm.slane %v62, 3
  %v76 = vmul.f32 %v65, %v68
  %v77 = vmul.f32 %v65, %v69
  %v78 = vmul.f32 %v65, %v70
  %v79 = vmul.f32 %v65, %v71
  %v80 = vadd.f32 %v57, %v76
  %v81 = vadd.f32 %v58, %v77
  %v82 = vadd.f32 %v59, %v78
  %v83 = vadd.f32 %v60, %v79
  %v84 = vld [vmem:[%s0] ss:$4 sm:$0x1f]
  %85 = vset.pattern.permute.xlu0 3
  %86 = vperm.xlu0 %85, %v14
  %v87 = vpop.permute.xlu0 %86
  %v90 = vperm.slane %v84, 0
  %v91 = vperm.slane %v84, 1
  %v92 = vperm.slane %v84, 2
  %v93 = vperm.slane %v84, 3
  %v94 = vperm.slane %v84, 4
  %v100 = vmul.f32 %v87, %v90
  %v101 = vmul.f32 %v87, %v91
  %v102 = vmul.f32 %v87, %v92
  %v103 = vmul.f32 %v87, %v93
  %v104 = vmul.f32 %v87, %v94
  %110 = vrot.lane.b32.xlu0 %v100, 127
  %v111 = vpop.permute.xlu0 %110
  %112 = vrot.lane.b32.xlu0 %v101, 127
  %v113 = vpop.permute.xlu0 %112
  %114 = vrot.lane.b32.xlu0 %v102, 127
  %v115 = vpop.permute.xlu0 %114
  %116 = vrot.lane.b32.xlu0 %v103, 127
  %v117 = vpop.permute.xlu0 %116
  %118 = vrot.lane.b32.xlu0 %v104, 127
  %v119 = vpop.permute.xlu0 %118
  %vm120 = vcmask 1039360
  %v121 = vsel %vm120, %v111, %v113
  %v122 = vsel %vm120, %v113, %v115
  %v123 = vsel %vm120, %v115, %v117
  %v124 = vsel %vm120, %v117, %v119
  %v129 = vadd.f32 %v80, %v121
  %v130 = vadd.f32 %v81, %v122
  %v131 = vadd.f32 %v82, %v123
  %v132 = vadd.f32 %v83, %v124
  %v133 = vld [vmem:[%s38] ss:$4 sm:$0x1f]
  %134 = vset.pattern.permute.xlu0 4
  %135 = vperm.xlu0 %134, %v14
  %v136 = vpop.permute.xlu0 %135
  %v139 = vperm.slane %v133, 0
  %v140 = vperm.slane %v133, 1
  %v141 = vperm.slane %v133, 2
  %v142 = vperm.slane %v133, 3
  %v143 = vperm.slane %v133, 4
  %v149 = vmul.f32 %v136, %v139
  %v150 = vmul.f32 %v136, %v140
  %v151 = vmul.f32 %v136, %v141
  %v152 = vmul.f32 %v136, %v142
  %v153 = vmul.f32 %v136, %v143
  %159 = vrot.lane.b32.xlu0 %v149, 127
  %v160 = vpop.permute.xlu0 %159
  %161 = vrot.lane.b32.xlu0 %v150, 127
  %v162 = vpop.permute.xlu0 %161
  %163 = vrot.lane.b32.xlu0 %v151, 127
  %v164 = vpop.permute.xlu0 %163
  %165 = vrot.lane.b32.xlu0 %v152, 127
  %v166 = vpop.permute.xlu0 %165
  %167 = vrot.lane.b32.xlu0 %v153, 127
  %v168 = vpop.permute.xlu0 %167
  %v169 = vsel %vm120, %v160, %v162
  %v170 = vsel %vm120, %v162, %v164
  %v171 = vsel %vm120, %v164, %v166
  %v172 = vsel %vm120, %v166, %v168
  %v177 = vadd.f32 %v129, %v169
  %v178 = vadd.f32 %v130, %v170
  %v179 = vadd.f32 %v131, %v171
  %v180 = vadd.f32 %v132, %v172
  %v181 = vld [vmem:[%s61] ss:$4 sm:$0x1f]
  %182 = vset.pattern.permute.xlu0 5
  %183 = vperm.xlu0 %182, %v14
  %v184 = vpop.permute.xlu0 %183
  %v187 = vperm.slane %v181, 0
  %v188 = vperm.slane %v181, 1
  %v189 = vperm.slane %v181, 2
  %v190 = vperm.slane %v181, 3
  %v191 = vperm.slane %v181, 4
  %v197 = vmul.f32 %v184, %v187
  %v198 = vmul.f32 %v184, %v188
  %v199 = vmul.f32 %v184, %v189
  %v200 = vmul.f32 %v184, %v190
  %v201 = vmul.f32 %v184, %v191
  %207 = vrot.lane.b32.xlu0 %v197, 127
  %v208 = vpop.permute.xlu0 %207
  %209 = vrot.lane.b32.xlu0 %v198, 127
  %v210 = vpop.permute.xlu0 %209
  %211 = vrot.lane.b32.xlu0 %v199, 127
  %v212 = vpop.permute.xlu0 %211
  %213 = vrot.lane.b32.xlu0 %v200, 127
  %v214 = vpop.permute.xlu0 %213
  %215 = vrot.lane.b32.xlu0 %v201, 127
  %v216 = vpop.permute.xlu0 %215
  %v217 = vsel %vm120, %v208, %v210
  %v218 = vsel %vm120, %v210, %v212
  %v219 = vsel %vm120, %v212, %v214
  %v220 = vsel %vm120, %v214, %v216
  %v225 = vadd.f32 %v177, %v217
  %v226 = vadd.f32 %v178, %v218
  %v227 = vadd.f32 %v179, %v219
  %v228 = vadd.f32 %v180, %v220
  %229 = vset.pattern.permute.xlu0 6
  %230 = vperm.xlu0 %229, %v14
  %v231 = vpop.permute.xlu0 %230
  %v233 = vmul.f32 %v231, %v90
  %v234 = vmul.f32 %v231, %v91
  %v235 = vmul.f32 %v231, %v92
  %v236 = vmul.f32 %v231, %v93
  %v237 = vmul.f32 %v231, %v94
  %243 = vrot.lane.b32.xlu0 %v233, 126
  %v244 = vpop.permute.xlu0 %243
  %245 = vrot.lane.b32.xlu0 %v234, 126
  %v246 = vpop.permute.xlu0 %245
  %247 = vrot.lane.b32.xlu0 %v235, 126
  %v248 = vpop.permute.xlu0 %247
  %249 = vrot.lane.b32.xlu0 %v236, 126
  %v250 = vpop.permute.xlu0 %249
  %251 = vrot.lane.b32.xlu0 %v237, 126
  %v252 = vpop.permute.xlu0 %251
  %vm253 = vcmask 1031168
  %v254 = vsel %vm253, %v244, %v246
  %v255 = vsel %vm253, %v246, %v248
  %v256 = vsel %vm253, %v248, %v250
  %v257 = vsel %vm253, %v250, %v252
  %v262 = vadd.f32 %v225, %v254
  %v263 = vadd.f32 %v226, %v255
  %v264 = vadd.f32 %v227, %v256
  %v265 = vadd.f32 %v228, %v257
  %266 = vset.pattern.permute.xlu0 7
  %267 = vperm.xlu0 %266, %v14
  %v268 = vpop.permute.xlu0 %267
  %v270 = vmul.f32 %v268, %v139
  %v271 = vmul.f32 %v268, %v140
  %v272 = vmul.f32 %v268, %v141
  %v273 = vmul.f32 %v268, %v142
  %v274 = vmul.f32 %v268, %v143
  %280 = vrot.lane.b32.xlu0 %v270, 126
  %v281 = vpop.permute.xlu0 %280
  %282 = vrot.lane.b32.xlu0 %v271, 126
  %v283 = vpop.permute.xlu0 %282
  %284 = vrot.lane.b32.xlu0 %v272, 126
  %v285 = vpop.permute.xlu0 %284
  %286 = vrot.lane.b32.xlu0 %v273, 126
  %v287 = vpop.permute.xlu0 %286
  %288 = vrot.lane.b32.xlu0 %v274, 126
  %v289 = vpop.permute.xlu0 %288
  %v290 = vsel %vm253, %v281, %v283
  %v291 = vsel %vm253, %v283, %v285
  %v292 = vsel %vm253, %v285, %v287
  %v293 = vsel %vm253, %v287, %v289
  %v298 = vadd.f32 %v262, %v290
  %v299 = vadd.f32 %v263, %v291
  %v300 = vadd.f32 %v264, %v292
  %v301 = vadd.f32 %v265, %v293
  %302 = vset.pattern.permute.xlu0 8
  %303 = vperm.xlu0 %302, %v14
  %v304 = vpop.permute.xlu0 %303
  %v306 = vmul.f32 %v304, %v187
  %v307 = vmul.f32 %v304, %v188
  %v308 = vmul.f32 %v304, %v189
  %v309 = vmul.f32 %v304, %v190
  %v310 = vmul.f32 %v304, %v191
  %316 = vrot.lane.b32.xlu0 %v306, 126
  %v317 = vpop.permute.xlu0 %316
  %318 = vrot.lane.b32.xlu0 %v307, 126
  %v319 = vpop.permute.xlu0 %318
  %320 = vrot.lane.b32.xlu0 %v308, 126
  %v321 = vpop.permute.xlu0 %320
  %322 = vrot.lane.b32.xlu0 %v309, 126
  %v323 = vpop.permute.xlu0 %322
  %324 = vrot.lane.b32.xlu0 %v310, 126
  %v325 = vpop.permute.xlu0 %324
  %v326 = vsel %vm253, %v317, %v319
  %v327 = vsel %vm253, %v319, %v321
  %v328 = vsel %vm253, %v321, %v323
  %v329 = vsel %vm253, %v323, %v325
  %v334 = vadd.f32 %v298, %v326
  %v335 = vadd.f32 %v299, %v327
  %v336 = vadd.f32 %v300, %v328
  %v337 = vadd.f32 %v301, %v329
  %338 = vset.pattern.permute.xlu0 9
  %339 = vperm.xlu0 %338, %v14
  %v340 = vpop.permute.xlu0 %339
  %v342 = vmul.f32 %v340, %v90
  %v343 = vmul.f32 %v340, %v91
  %v344 = vmul.f32 %v340, %v92
  %v345 = vmul.f32 %v340, %v93
  %v346 = vmul.f32 %v340, %v94
  %352 = vrot.lane.b32.xlu0 %v342, 112
  %v353 = vpop.permute.xlu0 %352
  %354 = vrot.lane.b32.xlu0 %v343, 112
  %v355 = vpop.permute.xlu0 %354
  %356 = vrot.lane.b32.xlu0 %v344, 112
  %v357 = vpop.permute.xlu0 %356
  %358 = vrot.lane.b32.xlu0 %v345, 112
  %v359 = vpop.permute.xlu0 %358
  %360 = vrot.lane.b32.xlu0 %v346, 112
  %v361 = vpop.permute.xlu0 %360
  %vm362 = vcmask 916480
  %v363 = vsel %vm362, %v353, %v355
  %v364 = vsel %vm362, %v355, %v357
  %v365 = vsel %vm362, %v357, %v359
  %v366 = vsel %vm362, %v359, %v361
  %v371 = vadd.f32 %v334, %v363
  %v372 = vadd.f32 %v335, %v364
  %v373 = vadd.f32 %v336, %v365
  %v374 = vadd.f32 %v337, %v366
  %375 = vset.pattern.permute.xlu0 10
  %376 = vperm.xlu0 %375, %v14
  %v377 = vpop.permute.xlu0 %376
  %v379 = vmul.f32 %v377, %v139
  %v380 = vmul.f32 %v377, %v140
  %v381 = vmul.f32 %v377, %v141
  %v382 = vmul.f32 %v377, %v142
  %v383 = vmul.f32 %v377, %v143
  %389 = vrot.lane.b32.xlu0 %v379, 112
  %v390 = vpop.permute.xlu0 %389
  %391 = vrot.lane.b32.xlu0 %v380, 112
  %v392 = vpop.permute.xlu0 %391
  %393 = vrot.lane.b32.xlu0 %v381, 112
  %v394 = vpop.permute.xlu0 %393
  %395 = vrot.lane.b32.xlu0 %v382, 112
  %v396 = vpop.permute.xlu0 %395
  %397 = vrot.lane.b32.xlu0 %v383, 112
  %v398 = vpop.permute.xlu0 %397
  %v399 = vsel %vm362, %v390, %v392
  %v400 = vsel %vm362, %v392, %v394
  %v401 = vsel %vm362, %v394, %v396
  %v402 = vsel %vm362, %v396, %v398
  %v407 = vadd.f32 %v371, %v399
  %v408 = vadd.f32 %v372, %v400
  %v409 = vadd.f32 %v373, %v401
  %v410 = vadd.f32 %v374, %v402
  %411 = vset.pattern.permute.xlu0 11
  %412 = vperm.xlu0 %411, %v14
  %v413 = vpop.permute.xlu0 %412
  %v415 = vmul.f32 %v413, %v187
  %v416 = vmul.f32 %v413, %v188
  %v417 = vmul.f32 %v413, %v189
  %v418 = vmul.f32 %v413, %v190
  %v419 = vmul.f32 %v413, %v191
  %425 = vrot.lane.b32.xlu0 %v415, 112
  %v426 = vpop.permute.xlu0 %425
  %427 = vrot.lane.b32.xlu0 %v416, 112
  %v428 = vpop.permute.xlu0 %427
  %429 = vrot.lane.b32.xlu0 %v417, 112
  %v430 = vpop.permute.xlu0 %429
  %431 = vrot.lane.b32.xlu0 %v418, 112
  %v432 = vpop.permute.xlu0 %431
  %433 = vrot.lane.b32.xlu0 %v419, 112
  %v434 = vpop.permute.xlu0 %433
  %v435 = vsel %vm362, %v426, %v428
  %v436 = vsel %vm362, %v428, %v430
  %v437 = vsel %vm362, %v430, %v432
  %v438 = vsel %vm362, %v432, %v434
  %v443 = vadd.f32 %v407, %v435
  %v444 = vadd.f32 %v408, %v436
  %v445 = vadd.f32 %v409, %v437
  %v446 = vadd.f32 %v410, %v438
  %447 = vset.pattern.permute.xlu0 12
  %448 = vperm.xlu0 %447, %v14
  %v449 = vpop.permute.xlu0 %448
  %v451 = vmul.f32 %v449, %v90
  %v452 = vmul.f32 %v449, %v91
  %v453 = vmul.f32 %v449, %v92
  %v454 = vmul.f32 %v449, %v93
  %v455 = vmul.f32 %v449, %v94
  %461 = vrot.lane.b32.xlu0 %v451, 111
  %v462 = vpop.permute.xlu0 %461
  %463 = vrot.lane.b32.xlu0 %v452, 111
  %v464 = vpop.permute.xlu0 %463
  %465 = vrot.lane.b32.xlu0 %v453, 111
  %v466 = vpop.permute.xlu0 %465
  %467 = vrot.lane.b32.xlu0 %v454, 111
  %v468 = vpop.permute.xlu0 %467
  %469 = vrot.lane.b32.xlu0 %v455, 111
  %v470 = vpop.permute.xlu0 %469
  %vm471 = vcmask 908288
  %v472 = vsel %vm471, %v462, %v464
  %v473 = vsel %vm471, %v464, %v466
  %v474 = vsel %vm471, %v466, %v468
  %v475 = vsel %vm471, %v468, %v470
  %v480 = vadd.f32 %v443, %v472
  %v481 = vadd.f32 %v444, %v473
  %v482 = vadd.f32 %v445, %v474
  %v483 = vadd.f32 %v446, %v475
  %484 = vset.pattern.permute.xlu0 13
  %485 = vperm.xlu0 %484, %v14
  %v486 = vpop.permute.xlu0 %485
  %v488 = vmul.f32 %v486, %v139
  %v489 = vmul.f32 %v486, %v140
  %v490 = vmul.f32 %v486, %v141
  %v491 = vmul.f32 %v486, %v142
  %v492 = vmul.f32 %v486, %v143
  %498 = vrot.lane.b32.xlu0 %v488, 111
  %v499 = vpop.permute.xlu0 %498
  %500 = vrot.lane.b32.xlu0 %v489, 111
  %v501 = vpop.permute.xlu0 %500
  %502 = vrot.lane.b32.xlu0 %v490, 111
  %v503 = vpop.permute.xlu0 %502
  %504 = vrot.lane.b32.xlu0 %v491, 111
  %v505 = vpop.permute.xlu0 %504
  %506 = vrot.lane.b32.xlu0 %v492, 111
  %v507 = vpop.permute.xlu0 %506
  %v508 = vsel %vm471, %v499, %v501
  %v509 = vsel %vm471, %v501, %v503
  %v510 = vsel %vm471, %v503, %v505
  %v511 = vsel %vm471, %v505, %v507
  %v516 = vadd.f32 %v480, %v508
  %v517 = vadd.f32 %v481, %v509
  %v518 = vadd.f32 %v482, %v510
  %v519 = vadd.f32 %v483, %v511
  %520 = vset.pattern.permute.xlu0 14
  %521 = vperm.xlu0 %520, %v14
  %v522 = vpop.permute.xlu0 %521
  %v524 = vmul.f32 %v522, %v187
  %v525 = vmul.f32 %v522, %v188
  %v526 = vmul.f32 %v522, %v189
  %v527 = vmul.f32 %v522, %v190
  %v528 = vmul.f32 %v522, %v191
  %534 = vrot.lane.b32.xlu0 %v524, 111
  %v535 = vpop.permute.xlu0 %534
  %536 = vrot.lane.b32.xlu0 %v525, 111
  %v537 = vpop.permute.xlu0 %536
  %538 = vrot.lane.b32.xlu0 %v526, 111
  %v539 = vpop.permute.xlu0 %538
  %540 = vrot.lane.b32.xlu0 %v527, 111
  %v541 = vpop.permute.xlu0 %540
  %542 = vrot.lane.b32.xlu0 %v528, 111
  %v543 = vpop.permute.xlu0 %542
  %v544 = vsel %vm471, %v535, %v537
  %v545 = vsel %vm471, %v537, %v539
  %v546 = vsel %vm471, %v539, %v541
  %v547 = vsel %vm471, %v541, %v543
  %v552 = vadd.f32 %v516, %v544
  %v553 = vadd.f32 %v517, %v545
  %v554 = vadd.f32 %v518, %v546
  %v555 = vadd.f32 %v519, %v547
  %556 = vset.pattern.permute.xlu0 15
  %557 = vperm.xlu0 %556, %v14
  %v558 = vpop.permute.xlu0 %557
  %v560 = vmul.f32 %v558, %v90
  %v561 = vmul.f32 %v558, %v91
  %v562 = vmul.f32 %v558, %v92
  %v563 = vmul.f32 %v558, %v93
  %v564 = vmul.f32 %v558, %v94
  %570 = vrot.lane.b32.xlu0 %v560, 110
  %v571 = vpop.permute.xlu0 %570
  %572 = vrot.lane.b32.xlu0 %v561, 110
  %v573 = vpop.permute.xlu0 %572
  %574 = vrot.lane.b32.xlu0 %v562, 110
  %v575 = vpop.permute.xlu0 %574
  %576 = vrot.lane.b32.xlu0 %v563, 110
  %v577 = vpop.permute.xlu0 %576
  %578 = vrot.lane.b32.xlu0 %v564, 110
  %v579 = vpop.permute.xlu0 %578
  %vm580 = vcmask 900096
  %v581 = vsel %vm580, %v571, %v573
  %v582 = vsel %vm580, %v573, %v575
  %v583 = vsel %vm580, %v575, %v577
  %v584 = vsel %vm580, %v577, %v579
  %v589 = vadd.f32 %v552, %v581
  %v590 = vadd.f32 %v553, %v582
  %v591 = vadd.f32 %v554, %v583
  %v592 = vadd.f32 %v555, %v584
  %593 = vset.pattern.permute.xlu0 16
  %594 = vperm.xlu0 %593, %v14
  %v595 = vpop.permute.xlu0 %594
  %v597 = vmul.f32 %v595, %v139
  %v598 = vmul.f32 %v595, %v140
  %v599 = vmul.f32 %v595, %v141
  %v600 = vmul.f32 %v595, %v142
  %v601 = vmul.f32 %v595, %v143
  %607 = vrot.lane.b32.xlu0 %v597, 110
  %v608 = vpop.permute.xlu0 %607
  %609 = vrot.lane.b32.xlu0 %v598, 110
  %v610 = vpop.permute.xlu0 %609
  %611 = vrot.lane.b32.xlu0 %v599, 110
  %v612 = vpop.permute.xlu0 %611
  %613 = vrot.lane.b32.xlu0 %v600, 110
  %v614 = vpop.permute.xlu0 %613
  %615 = vrot.lane.b32.xlu0 %v601, 110
  %v616 = vpop.permute.xlu0 %615
  %v617 = vsel %vm580, %v608, %v610
  %v618 = vsel %vm580, %v610, %v612
  %v619 = vsel %vm580, %v612, %v614
  %v620 = vsel %vm580, %v614, %v616
  %v625 = vadd.f32 %v589, %v617
  %v626 = vadd.f32 %v590, %v618
  %v627 = vadd.f32 %v591, %v619
  %v628 = vadd.f32 %v592, %v620
  %629 = vset.pattern.permute.xlu0 17
  %630 = vperm.xlu0 %629, %v14
  %v631 = vpop.permute.xlu0 %630
  %v633 = vmul.f32 %v631, %v187
  %v634 = vmul.f32 %v631, %v188
  %v635 = vmul.f32 %v631, %v189
  %v636 = vmul.f32 %v631, %v190
  %v637 = vmul.f32 %v631, %v191
  %643 = vrot.lane.b32.xlu0 %v633, 110
  %v644 = vpop.permute.xlu0 %643
  %645 = vrot.lane.b32.xlu0 %v634, 110
  %v646 = vpop.permute.xlu0 %645
  %647 = vrot.lane.b32.xlu0 %v635, 110
  %v648 = vpop.permute.xlu0 %647
  %649 = vrot.lane.b32.xlu0 %v636, 110
  %v650 = vpop.permute.xlu0 %649
  %651 = vrot.lane.b32.xlu0 %v637, 110
  %v652 = vpop.permute.xlu0 %651
  %v653 = vsel %vm580, %v644, %v646
  %v654 = vsel %vm580, %v646, %v648
  %v655 = vsel %vm580, %v648, %v650
  %v656 = vsel %vm580, %v650, %v652
  %v661 = vadd.f32 %v625, %v653
  %v662 = vadd.f32 %v626, %v654
  %v663 = vadd.f32 %v627, %v655
  %v664 = vadd.f32 %v628, %v656
  %665 = vset.pattern.permute.xlu0 18
  %666 = vperm.xlu0 %665, %v14
  %v667 = vpop.permute.xlu0 %666
  %v669 = vmul.f32 %v667, %v90
  %v670 = vmul.f32 %v667, %v91
  %v671 = vmul.f32 %v667, %v92
  %v672 = vmul.f32 %v667, %v93
  %v673 = vmul.f32 %v667, %v94
  %679 = vrot.lane.b32.xlu0 %v669, 96
  %v680 = vpop.permute.xlu0 %679
  %681 = vrot.lane.b32.xlu0 %v670, 96
  %v682 = vpop.permute.xlu0 %681
  %683 = vrot.lane.b32.xlu0 %v671, 96
  %v684 = vpop.permute.xlu0 %683
  %685 = vrot.lane.b32.xlu0 %v672, 96
  %v686 = vpop.permute.xlu0 %685
  %687 = vrot.lane.b32.xlu0 %v673, 96
  %v688 = vpop.permute.xlu0 %687
  %vm689 = vcmask 785408
  %v690 = vsel %vm689, %v680, %v682
  %v691 = vsel %vm689, %v682, %v684
  %v692 = vsel %vm689, %v684, %v686
  %v693 = vsel %vm689, %v686, %v688
  %v698 = vadd.f32 %v661, %v690
  %v699 = vadd.f32 %v662, %v691
  %v700 = vadd.f32 %v663, %v692
  %v701 = vadd.f32 %v664, %v693
  %702 = vset.pattern.permute.xlu0 19
  %703 = vperm.xlu0 %702, %v14
  %v704 = vpop.permute.xlu0 %703
  %v706 = vmul.f32 %v704, %v139
  %v707 = vmul.f32 %v704, %v140
  %v708 = vmul.f32 %v704, %v141
  %v709 = vmul.f32 %v704, %v142
  %v710 = vmul.f32 %v704, %v143
  %716 = vrot.lane.b32.xlu0 %v706, 96
  %v717 = vpop.permute.xlu0 %716
  %718 = vrot.lane.b32.xlu0 %v707, 96
  %v719 = vpop.permute.xlu0 %718
  %720 = vrot.lane.b32.xlu0 %v708, 96
  %v721 = vpop.permute.xlu0 %720
  %722 = vrot.lane.b32.xlu0 %v709, 96
  %v723 = vpop.permute.xlu0 %722
  %724 = vrot.lane.b32.xlu0 %v710, 96
  %v725 = vpop.permute.xlu0 %724
  %v726 = vsel %vm689, %v717, %v719
  %v727 = vsel %vm689, %v719, %v721
  %v728 = vsel %vm689, %v721, %v723
  %v729 = vsel %vm689, %v723, %v725
  %v734 = vadd.f32 %v698, %v726
  %v735 = vadd.f32 %v699, %v727
  %v736 = vadd.f32 %v700, %v728
  %v737 = vadd.f32 %v701, %v729
  %738 = vset.pattern.permute.xlu0 20
  %739 = vperm.xlu0 %738, %v14
  %v740 = vpop.permute.xlu0 %739
  %v742 = vmul.f32 %v740, %v187
  %v743 = vmul.f32 %v740, %v188
  %v744 = vmul.f32 %v740, %v189
  %v745 = vmul.f32 %v740, %v190
  %v746 = vmul.f32 %v740, %v191
  %752 = vrot.lane.b32.xlu0 %v742, 96
  %v753 = vpop.permute.xlu0 %752
  %754 = vrot.lane.b32.xlu0 %v743, 96
  %v755 = vpop.permute.xlu0 %754
  %756 = vrot.lane.b32.xlu0 %v744, 96
  %v757 = vpop.permute.xlu0 %756
  %758 = vrot.lane.b32.xlu0 %v745, 96
  %v759 = vpop.permute.xlu0 %758
  %760 = vrot.lane.b32.xlu0 %v746, 96
  %v761 = vpop.permute.xlu0 %760
  %v762 = vsel %vm689, %v753, %v755
  %v763 = vsel %vm689, %v755, %v757
  %v764 = vsel %vm689, %v757, %v759
  %v765 = vsel %vm689, %v759, %v761
  %v770 = vadd.f32 %v734, %v762
  %v771 = vadd.f32 %v735, %v763
  %v772 = vadd.f32 %v736, %v764
  %v773 = vadd.f32 %v737, %v765
  %774 = vset.pattern.permute.xlu0 21
  %775 = vperm.xlu0 %774, %v14
  %v776 = vpop.permute.xlu0 %775
  %v778 = vmul.f32 %v776, %v90
  %v779 = vmul.f32 %v776, %v91
  %v780 = vmul.f32 %v776, %v92
  %v781 = vmul.f32 %v776, %v93
  %v782 = vmul.f32 %v776, %v94
  %788 = vrot.lane.b32.xlu0 %v778, 95
  %v789 = vpop.permute.xlu0 %788
  %790 = vrot.lane.b32.xlu0 %v779, 95
  %v791 = vpop.permute.xlu0 %790
  %792 = vrot.lane.b32.xlu0 %v780, 95
  %v793 = vpop.permute.xlu0 %792
  %794 = vrot.lane.b32.xlu0 %v781, 95
  %v795 = vpop.permute.xlu0 %794
  %796 = vrot.lane.b32.xlu0 %v782, 95
  %v797 = vpop.permute.xlu0 %796
  %vm798 = vcmask 777216
  %v799 = vsel %vm798, %v789, %v791
  %v800 = vsel %vm798, %v791, %v793
  %v801 = vsel %vm798, %v793, %v795
  %v802 = vsel %vm798, %v795, %v797
  %v807 = vadd.f32 %v770, %v799
  %v808 = vadd.f32 %v771, %v800
  %v809 = vadd.f32 %v772, %v801
  %v810 = vadd.f32 %v773, %v802
  %811 = vset.pattern.permute.xlu0 22
  %812 = vperm.xlu0 %811, %v14
  %v813 = vpop.permute.xlu0 %812
  %v815 = vmul.f32 %v813, %v139
  %v816 = vmul.f32 %v813, %v140
  %v817 = vmul.f32 %v813, %v141
  %v818 = vmul.f32 %v813, %v142
  %v819 = vmul.f32 %v813, %v143
  %825 = vrot.lane.b32.xlu0 %v815, 95
  %v826 = vpop.permute.xlu0 %825
  %827 = vrot.lane.b32.xlu0 %v816, 95
  %v828 = vpop.permute.xlu0 %827
  %829 = vrot.lane.b32.xlu0 %v817, 95
  %v830 = vpop.permute.xlu0 %829
  %831 = vrot.lane.b32.xlu0 %v818, 95
  %v832 = vpop.permute.xlu0 %831
  %833 = vrot.lane.b32.xlu0 %v819, 95
  %v834 = vpop.permute.xlu0 %833
  %v835 = vsel %vm798, %v826, %v828
  %v836 = vsel %vm798, %v828, %v830
  %v837 = vsel %vm798, %v830, %v832
  %v838 = vsel %vm798, %v832, %v834
  %v843 = vadd.f32 %v807, %v835
  %v844 = vadd.f32 %v808, %v836
  %v845 = vadd.f32 %v809, %v837
  %v846 = vadd.f32 %v810, %v838
  %847 = vset.pattern.permute.xlu0 23
  %848 = vperm.xlu0 %847, %v14
  %v849 = vpop.permute.xlu0 %848
  %v851 = vmul.f32 %v849, %v187
  %v852 = vmul.f32 %v849, %v188
  %v853 = vmul.f32 %v849, %v189
  %v854 = vmul.f32 %v849, %v190
  %v855 = vmul.f32 %v849, %v191
  %861 = vrot.lane.b32.xlu0 %v851, 95
  %v862 = vpop.permute.xlu0 %861
  %863 = vrot.lane.b32.xlu0 %v852, 95
  %v864 = vpop.permute.xlu0 %863
  %865 = vrot.lane.b32.xlu0 %v853, 95
  %v866 = vpop.permute.xlu0 %865
  %867 = vrot.lane.b32.xlu0 %v854, 95
  %v868 = vpop.permute.xlu0 %867
  %869 = vrot.lane.b32.xlu0 %v855, 95
  %v870 = vpop.permute.xlu0 %869
  %v871 = vsel %vm798, %v862, %v864
  %v872 = vsel %vm798, %v864, %v866
  %v873 = vsel %vm798, %v866, %v868
  %v874 = vsel %vm798, %v868, %v870
  %v879 = vadd.f32 %v843, %v871
  %v880 = vadd.f32 %v844, %v872
  %v881 = vadd.f32 %v845, %v873
  %v882 = vadd.f32 %v846, %v874
  %883 = vset.pattern.permute.xlu0 24
  %884 = vperm.xlu0 %883, %v14
  %v885 = vpop.permute.xlu0 %884
  %v887 = vmul.f32 %v885, %v90
  %v888 = vmul.f32 %v885, %v91
  %v889 = vmul.f32 %v885, %v92
  %v890 = vmul.f32 %v885, %v93
  %v891 = vmul.f32 %v885, %v94
  %897 = vrot.lane.b32.xlu0 %v887, 94
  %v898 = vpop.permute.xlu0 %897
  %899 = vrot.lane.b32.xlu0 %v888, 94
  %v900 = vpop.permute.xlu0 %899
  %901 = vrot.lane.b32.xlu0 %v889, 94
  %v902 = vpop.permute.xlu0 %901
  %903 = vrot.lane.b32.xlu0 %v890, 94
  %v904 = vpop.permute.xlu0 %903
  %905 = vrot.lane.b32.xlu0 %v891, 94
  %v906 = vpop.permute.xlu0 %905
  %vm907 = vcmask 769024
  %v908 = vsel %vm907, %v898, %v900
  %v909 = vsel %vm907, %v900, %v902
  %v910 = vsel %vm907, %v902, %v904
  %v911 = vsel %vm907, %v904, %v906
  %v916 = vadd.f32 %v879, %v908
  %v917 = vadd.f32 %v880, %v909
  %v918 = vadd.f32 %v881, %v910
  %v919 = vadd.f32 %v882, %v911
  %920 = vset.pattern.permute.xlu0 25
  %921 = vperm.xlu0 %920, %v14
  %v922 = vpop.permute.xlu0 %921
  %v924 = vmul.f32 %v922, %v139
  %v925 = vmul.f32 %v922, %v140
  %v926 = vmul.f32 %v922, %v141
  %v927 = vmul.f32 %v922, %v142
  %v928 = vmul.f32 %v922, %v143
  %934 = vrot.lane.b32.xlu0 %v924, 94
  %v935 = vpop.permute.xlu0 %934
  %936 = vrot.lane.b32.xlu0 %v925, 94
  %v937 = vpop.permute.xlu0 %936
  %938 = vrot.lane.b32.xlu0 %v926, 94
  %v939 = vpop.permute.xlu0 %938
  %940 = vrot.lane.b32.xlu0 %v927, 94
  %v941 = vpop.permute.xlu0 %940
  %942 = vrot.lane.b32.xlu0 %v928, 94
  %v943 = vpop.permute.xlu0 %942
  %v944 = vsel %vm907, %v935, %v937
  %v945 = vsel %vm907, %v937, %v939
  %v946 = vsel %vm907, %v939, %v941
  %v947 = vsel %vm907, %v941, %v943
  %v952 = vadd.f32 %v916, %v944
  %v953 = vadd.f32 %v917, %v945
  %v954 = vadd.f32 %v918, %v946
  %v955 = vadd.f32 %v919, %v947
  %956 = vset.pattern.permute.xlu0 26
  %957 = vperm.xlu0 %956, %v14
  %v958 = vpop.permute.xlu0 %957
  %v960 = vmul.f32 %v958, %v187
  %v961 = vmul.f32 %v958, %v188
  %v962 = vmul.f32 %v958, %v189
  %v963 = vmul.f32 %v958, %v190
  %v964 = vmul.f32 %v958, %v191
  %970 = vrot.lane.b32.xlu0 %v960, 94
  %v971 = vpop.permute.xlu0 %970
  %972 = vrot.lane.b32.xlu0 %v961, 94
  %v973 = vpop.permute.xlu0 %972
  %974 = vrot.lane.b32.xlu0 %v962, 94
  %v975 = vpop.permute.xlu0 %974
  %976 = vrot.lane.b32.xlu0 %v963, 94
  %v977 = vpop.permute.xlu0 %976
  %978 = vrot.lane.b32.xlu0 %v964, 94
  %v979 = vpop.permute.xlu0 %978
  %v980 = vsel %vm907, %v971, %v973
  %v981 = vsel %vm907, %v973, %v975
  %v982 = vsel %vm907, %v975, %v977
  %v983 = vsel %vm907, %v977, %v979
  %v988 = vadd.f32 %v952, %v980
  %v989 = vadd.f32 %v953, %v981
  %v990 = vadd.f32 %v954, %v982
  %v991 = vadd.f32 %v955, %v983
  %v992 = vld [vmem:[%s2] sm:$0xff]
  %994 = vset.pattern.permute.xlu0 0
  %995 = vperm.xlu0 %994, %v992
  %v996 = vpop.permute.xlu0 %995
  %v998 = vadd.f32 %v988, %v996
  %v999 = vadd.f32 %v989, %v996
  %v1000 = vadd.f32 %v990, %v996
  %v1001 = vadd.f32 %v991, %v996
  %v1002 = vmax.f32 %v998, 0.0
  %v1003 = vmax.f32 %v999, 0.0
  %v1004 = vmax.f32 %v1000, 0.0
  %v1005 = vmax.f32 %v1001, 0.0
  %1006 = vst [vmem:[%s3] sm:$0xff] %v1002
  %1007 = vst [vmem:[%s3 + $0x8] sm:$0xff] %v1003
  %1008 = vst [vmem:[%s3 + $0x10] sm:$0xff] %v1004
  %1009 = vst [vmem:[%s3 + $0x18] sm:$0xff] %v1005
  // Predicated region
  $region14: #{simple_forward.1} parent=0 // pred_check
    _
  $region15: #{simple_forward.1} parent=0 // pred_check_branch
    %1011 = sbr.rel (0) target = $region17
  $region16: #{simple_forward.1} parent=0 // pred_region
    _
  $region17: #{simple_forward.1} parent=0 // pred_fallthru
    _
  // Predicated region
  $region18: #{simple_forward.1} parent=0 // pred_check
    _
  $region19: #{simple_forward.1} parent=0 // pred_check_branch
    %1013 = sbr.rel (0) target = $region21
  $region20: #{simple_forward.1} parent=0 // pred_region
    _
  $region21: #{simple_forward.1} parent=0 // pred_fallthru
    _

</llo_original>
